<compile_context>
chip_gen: v5e
topology: v5e:2x2
jax: 0.10.0
libtpu: 0.0.40
codegen_flags: <defaults>
</compile_context>

<pallas_src>
import jax
import jax.numpy as jnp
from jax.experimental import pallas as pl
from jax.experimental.pallas import tpu as pltpu

_LANE = 128


def _cardioid_kernel(re_ref, im_ref, ore_ref, oim_ref):
    re = re_ref[...]                      # (tr, 128) float32
    im = im_ref[...]
    # Scale-robust cos(angle(z)) = Re(z)/|z|: normalize by max(|re|,|im|)
    # before squaring so neither overflow nor underflow occurs.
    m = jnp.maximum(jnp.abs(re), jnp.abs(im))
    inv_m = 1.0 / jnp.where(m == 0.0, 1.0, m)
    rn = re * inv_m
    imn = im * inv_m
    mag2 = rn * rn + imn * imn            # in [1, 2] for z != 0; 0 only for z == 0
    # Guard z == 0: rsqrt(0)=inf would give 0*inf=nan.  With the guard
    # cos = 0, scale = 0.5, and the output is still exactly 0 (re = im = 0),
    # matching torch (angle(0) = 0 -> out = 0).
    cos = rn * jax.lax.rsqrt(jnp.where(mag2 == 0.0, 1.0, mag2))
    scale = 0.5 + 0.5 * cos               # = 0.5 * (1 + cos(angle(z)))
    ore_ref[...] = scale * re
    oim_ref[...] = scale * im


def _tensorcores_per_chip() -> int:
    """Best-effort TensorCore count of the local chip (defaults to 1)."""
    try:
        info = pltpu.get_tpu_info()
        for attr in ("num_cores", "core_count", "num_tensorcores",
                     "tensorcores_per_chip"):
            v = getattr(info, attr, None)
            if isinstance(v, int) and v > 0:
                return v
    except Exception:
        pass
    try:
        kind = jax.devices()[0].device_kind.lower()
        if any(t in kind for t in ("v7", "v4", "v5p")):
            return 2
    except Exception:
        pass
    return 1


def complex_cardioid_planar(re: jax.Array, im: jax.Array, *,
                            tile_rows: int = 4096):
    """Cardioid on planar float32 data shaped (rows, 128); returns (re, im)."""
    assert re.shape == im.shape and re.ndim == 2 and re.shape[1] == _LANE
    assert re.dtype == jnp.float32 and im.dtype == jnp.float32
    rows = re.shape[0]
    nelem = rows * _LANE

    tr = min(tile_rows, rows)
    # Guarantee >=4 grid blocks (>=2 per core) on multi-TensorCore chips so
    # both cores get work AND each core software-pipelines its DMAs.  On
    # single-core chips extra grid steps are pure overhead, so keep one block
    # when everything fits.
    if _tensorcores_per_chip() > 1 and rows >= 32:
        tr = min(tr, ((pl.cdiv(rows, 4) + 7) // 8) * 8)
    grid = (pl.cdiv(rows, tr),)

    spec = pl.BlockSpec((tr, _LANE), lambda i: (i, 0))
    return pl.pallas_call(
        _cardioid_kernel,
        out_shape=(jax.ShapeDtypeStruct((rows, _LANE), jnp.float32),
                   jax.ShapeDtypeStruct((rows, _LANE), jnp.float32)),
        grid_spec=pltpu.PrefetchScalarGridSpec(
            num_scalar_prefetch=0,
            grid=grid,
            in_specs=[spec, spec],
            out_specs=[spec, spec],
        ),
        compiler_params=pltpu.CompilerParams(
            dimension_semantics=("parallel",),
            # 2 in + 2 out blocks, double-buffered, 2 MiB each -> 16 MiB.
            # Explicit limit: above v5e's 16 MiB scoped default, with ample
            # headroom under v7x's 64 MiB physical VMEM.
            vmem_limit_bytes=32 << 20,
        ),
        # Elementwise: output planes reuse the input planes' HBM buffers.
        input_output_aliases={0: 0, 1: 1},
        cost_estimate=pl.CostEstimate(
            flops=14 * nelem, transcendentals=2 * nelem,
            bytes_accessed=16 * nelem),
    )(re, im)


def complex_cardioid(z: jax.Array, *, tile_rows: int = 4096) -> jax.Array:
    """Apply the Complex Cardioid activation elementwise to a complex array."""
    if z.dtype != jnp.complex64:
        # TODO(synk): complex128 would need float64 planes (poorly supported on
        # TPU); restrict to complex64 rather than silently downcasting.
        raise NotImplementedError(f"complex_cardioid: unsupported dtype {z.dtype}")
    orig_shape = z.shape
    n = z.size

    re = jnp.real(z).reshape(-1)
    im = jnp.imag(z).reshape(-1)
    # Pad only when the element count is not a 128-lane multiple (rare for
    # NCHW tensors); otherwise the reshape below is metadata-only.
    rem = (-n) % _LANE
    if rem:
        re = jnp.pad(re, (0, rem))
        im = jnp.pad(im, (0, rem))
    rows = (n + rem) // _LANE

    out_re, out_im = complex_cardioid_planar(
        re.reshape(rows, _LANE), im.reshape(rows, _LANE), tile_rows=tile_rows)

    out_re = out_re.reshape(-1)
    out_im = out_im.reshape(-1)
    if rem:
        out_re = out_re[:n]
        out_im = out_im[:n]
    return jax.lax.complex(out_re.reshape(orig_shape), out_im.reshape(orig_shape))


def complex_cardioid_ref(z: jax.Array) -> jax.Array:
    """Pure-JAX reference matching torch semantics."""
    ang = jnp.angle(z)
    return (0.5 * (1.0 + jnp.cos(ang))).astype(jnp.float32) * z


if __name__ == "__main__":
    key = jax.random.PRNGKey(0)
    k1, k2 = jax.random.split(key)
    # NCHW complex input: batch=2, channels=4, spatial=16x16
    shape = (2, 4, 16, 16)
    re = jax.random.normal(k1, shape, dtype=jnp.float32)
    im = jax.random.normal(k2, shape, dtype=jnp.float32)
    z = jax.lax.complex(re, im)

    out = jax.block_until_ready(complex_cardioid(z))
    ref = complex_cardioid_ref(z)

    assert out.shape == shape and out.dtype == jnp.complex64
    assert jnp.allclose(out, ref, atol=1e-5, rtol=1e-5)
    print("KERNEL_OK")
</pallas_src>

<mosaic_0001>
module attributes {stable_mosaic.version = 11 : i64} {
  func.func @_cardioid_kernel(%arg0: i32, %arg1: memref<16x128xf32, #tpu.memory_space<vmem>>, %arg2: memref<16x128xf32, #tpu.memory_space<vmem>>, %arg3: memref<16x128xf32, #tpu.memory_space<vmem>>, %arg4: memref<16x128xf32, #tpu.memory_space<vmem>>) attributes {dimension_semantics = [#tpu.dimension_semantics<parallel>], iteration_bounds = array<i64: 1>, scalar_prefetch = 0 : i64, scratch_operands = 0 : i64, tpu.core_type = #tpu.core_type<tc>, window_params = [{transform_indices = @transform_0, window_bounds = array<i64: 16, 128>}, {transform_indices = @transform_1, window_bounds = array<i64: 16, 128>}, {transform_indices = @transform_2, window_bounds = array<i64: 16, 128>}, {transform_indices = @transform_3, window_bounds = array<i64: 16, 128>}]} {
    %c0 = arith.constant 0 : index
    %c0_0 = arith.constant 0 : index
    %0 = vector.load %arg1[%c0, %c0_0] : memref<16x128xf32, #tpu.memory_space<vmem>>, vector<16x128xf32>
    %c0_1 = arith.constant 0 : index
    %c0_2 = arith.constant 0 : index
    %1 = vector.load %arg2[%c0_1, %c0_2] : memref<16x128xf32, #tpu.memory_space<vmem>>, vector<16x128xf32>
    %2 = math.absf %0 : vector<16x128xf32>
    %3 = math.absf %1 : vector<16x128xf32>
    %4 = arith.maximumf %2, %3 : vector<16x128xf32>
    %cst = arith.constant 0.000000e+00 : f32
    %5 = vector.broadcast %cst : f32 to vector<16x128xf32>
    %6 = arith.cmpf oeq, %4, %5 : vector<16x128xf32>
    %cst_3 = arith.constant 1.000000e+00 : f32
    %7 = vector.broadcast %cst_3 : f32 to vector<16x128xf32>
    %8 = arith.select %6, %7, %4 : vector<16x128xi1>, vector<16x128xf32>
    %cst_4 = arith.constant 1.000000e+00 : f32
    %9 = vector.broadcast %cst_4 : f32 to vector<16x128xf32>
    %10 = arith.divf %9, %8 : vector<16x128xf32>
    %11 = arith.mulf %0, %10 : vector<16x128xf32>
    %12 = arith.mulf %1, %10 : vector<16x128xf32>
    %13 = arith.mulf %11, %11 : vector<16x128xf32>
    %14 = arith.mulf %12, %12 : vector<16x128xf32>
    %15 = arith.addf %13, %14 : vector<16x128xf32>
    %cst_5 = arith.constant 0.000000e+00 : f32
    %16 = vector.broadcast %cst_5 : f32 to vector<16x128xf32>
    %17 = arith.cmpf oeq, %15, %16 : vector<16x128xf32>
    %cst_6 = arith.constant 1.000000e+00 : f32
    %18 = vector.broadcast %cst_6 : f32 to vector<16x128xf32>
    %19 = arith.select %17, %18, %15 : vector<16x128xi1>, vector<16x128xf32>
    %20 = math.rsqrt %19 : vector<16x128xf32>
    %21 = arith.mulf %11, %20 : vector<16x128xf32>
    %cst_7 = arith.constant 5.000000e-01 : f32
    %22 = vector.broadcast %cst_7 : f32 to vector<16x128xf32>
    %23 = arith.mulf %22, %21 : vector<16x128xf32>
    %cst_8 = arith.constant 5.000000e-01 : f32
    %24 = vector.broadcast %cst_8 : f32 to vector<16x128xf32>
    %25 = arith.addf %24, %23 : vector<16x128xf32>
    %26 = arith.mulf %25, %0 : vector<16x128xf32>
    %c0_9 = arith.constant 0 : index
    %c0_10 = arith.constant 0 : index
    %27 = vector.load %arg3[%c0_9, %c0_10] : memref<16x128xf32, #tpu.memory_space<vmem>>, vector<16x128xf32>
    tpu.vector_store %arg3[%c0_9, %c0_10], %26 {strides = array<i32>} : memref<16x128xf32, #tpu.memory_space<vmem>>, vector<16x128xf32>,
    %28 = arith.mulf %25, %1 : vector<16x128xf32>
    %c0_11 = arith.constant 0 : index
    %c0_12 = arith.constant 0 : index
    %29 = vector.load %arg4[%c0_11, %c0_12] : memref<16x128xf32, #tpu.memory_space<vmem>>, vector<16x128xf32>
    tpu.vector_store %arg4[%c0_11, %c0_12], %28 {strides = array<i32>} : memref<16x128xf32, #tpu.memory_space<vmem>>, vector<16x128xf32>,
    return
  }
  func.func @transform_0(%arg0: i32) -> (i32, i32) {
    %c0_i32 = arith.constant 0 : i32
    %c0_i32_0 = arith.constant 0 : i32
    return %arg0, %c0_i32 : i32, i32
  }
  func.func @transform_1(%arg0: i32) -> (i32, i32) {
    %c0_i32 = arith.constant 0 : i32
    %c0_i32_0 = arith.constant 0 : i32
    return %arg0, %c0_i32 : i32, i32
  }
  func.func @transform_2(%arg0: i32) -> (i32, i32) {
    %c0_i32 = arith.constant 0 : i32
    %c0_i32_0 = arith.constant 0 : i32
    return %arg0, %c0_i32 : i32, i32
  }
  func.func @transform_3(%arg0: i32) -> (i32, i32) {
    %c0_i32 = arith.constant 0 : i32
    %c0_i32_0 = arith.constant 0 : i32
    return %arg0, %c0_i32 : i32, i32
  }
}

</mosaic_0001>

<llo_original>
// kernel: tpu_custom_call.1
$region0: #{tpu_custom_call.1}
  #allocation0 [shape = 'u32[]', space=smem, size = 0x4, offset = 0x4, fixed_abs, tag = 'smem constant byte address 0x4 - core index']
  #allocation1 [shape = 'u32[72,128]{1,0:T(1,128)}', space=vmem, size = 0x9000, scoped, tag = 'internal scratch']
  %s0 = inlined_call_operand.hbm [shape: f32[16,128], index: 0, kind: input, shape index: {}, may-alias: {0,2}]
  %s1 = inlined_call_operand.hbm [shape: f32[16,128], index: 1, kind: input, shape index: {}, may-alias: {1,3}]
  %s2 = inlined_call_operand.hbm [shape: f32[16,128], index: 2, kind: output, shape index: {0}, may-alias: {0,2}]
  %s3 = inlined_call_operand.hbm [shape: f32[16,128], index: 3, kind: output, shape index: {1}, may-alias: {1,3}]
  %4 = xla_tuple %s2, %s3
  %s5 = sld [smem:[#allocation0]]
  $region34: #{tpu_custom_call.1} parent=0
    _
  %s7 = ssub.s32 1, %s5
  %s8 = scalar_select 0, %s7, %s5
  $region1: #{tpu_custom_call.1} parent=0
    #allocation2 [shape = 'u8[8192]{0}', space=vmem, size = 0x2000, scoped, tag = 'input window, operand 0, single buffered']
    #allocation3 [shape = 's32[1]{0}', space=sflag, size = 0x4, scoped, tag = 'scoped memory for tpu_custom_call.1']
    #allocation4 [shape = 's32[1]{0}', space=sflag, size = 0x4, scoped, tag = 'scoped memory for tpu_custom_call.1']
    #allocation5 [shape = 'u8[8192]{0}', space=vmem, size = 0x2000, scoped, tag = 'input window, operand 1, single buffered']
    #allocation6 [shape = 's32[1]{0}', space=sflag, size = 0x4, scoped, tag = 'scoped memory for tpu_custom_call.1']
    #allocation7 [shape = 'u8[8192]{0}', space=vmem, size = 0x2000, scoped, tag = 'output window, operand 0, single buffered']
    #allocation8 [shape = 'u8[8192]{0}', space=vmem, size = 0x2000, scoped, tag = 'output window, operand 1, single buffered']
    #allocation9 [shape = 's32[1]{0}', space=sflag, size = 0x4, scoped, tag = 'scoped memory for tpu_custom_call.1']
    %9 = vsyncpa [#allocation3], 0
    %10 = vsyncpa [#allocation6], 0
    %11 = vsyncpa [#allocation4], 0
    %12 = vsyncpa [#allocation9], 0
    // Predicated region
    $region2: #{tpu_custom_call.1} parent=1 // pred_check
      _
    $region3: #{tpu_custom_call.1} parent=1 // pred_check_branch
      %14 = sbr.rel (0) target = $region5
    $region4: #{tpu_custom_call.1} parent=1 // pred_region
      %16 = vsyncadd [#allocation3], 0
      %s17 = sshll.u32 %s0, 4
      %s18 = int_to_ptr.hbm [resolvable:$true] %s17
      %s19 = sshll.u32 [#allocation2], 4
      %s20 = int_to_ptr.vmem [resolvable:$true] %s19
      %25 = dma.hbm_to_vmem [thread:$0]  %s18, 256, %s20, [#allocation3], 128, 128, 8
    $region5: #{tpu_custom_call.1} parent=1 // pred_fallthru
      _
    // Predicated region
    $region6: #{tpu_custom_call.1} parent=1 // pred_check
      _
    $region7: #{tpu_custom_call.1} parent=1 // pred_check_branch
      %27 = sbr.rel (0) target = $region9
    $region8: #{tpu_custom_call.1} parent=1 // pred_region
      %29 = vsyncadd [#allocation6], 0
      %s30 = sshll.u32 %s1, 4
      %s31 = int_to_ptr.hbm [resolvable:$true] %s30
      %s32 = sshll.u32 [#allocation5], 4
      %s33 = int_to_ptr.vmem [resolvable:$true] %s32
      %38 = dma.hbm_to_vmem [thread:$0]  %s31, 256, %s33, [#allocation6], 128, 128, 8
    $region9: #{tpu_custom_call.1} parent=1 // pred_fallthru
      _
    // Predicated region
    $region10: #{tpu_custom_call.1} parent=1 // pred_check
      _
    $region11: #{tpu_custom_call.1} parent=1 // pred_check_branch
      %40 = sbr.rel (0) target = $region13
    $region12: #{tpu_custom_call.1} parent=1 // pred_region
      %42 = dma.done [#allocation3], 256
    $region13: #{tpu_custom_call.1} parent=1 // pred_fallthru
      _
    // Predicated region
    $region14: #{tpu_custom_call.1} parent=1 // pred_check
      _
    $region15: #{tpu_custom_call.1} parent=1 // pred_check_branch
      %44 = sbr.rel (0) target = $region17
    $region16: #{tpu_custom_call.1} parent=1 // pred_region
      %46 = dma.done [#allocation6], 256
    $region17: #{tpu_custom_call.1} parent=1 // pred_fallthru
      _
    %v47 = vld [vmem:[#allocation2] sm:$0xff]
    %v48 = vld [vmem:[#allocation2 + $0x8] sm:$0xff]
    %v49 = vld [vmem:[#allocation5] sm:$0xff]
    %v50 = vld [vmem:[#allocation5 + $0x8] sm:$0xff]
    %v51 = vand.u32 2147483647, %v47
    %v52 = vand.u32 2147483647, %v48
    %v53 = vand.u32 2147483647, %v49
    %v54 = vand.u32 2147483647, %v50
    %v55 = vmax.f32 %v51, %v53
    %v56 = vmax.f32 %v52, %v54
    %vm57 = vcmp.eq.f32.partialorder %v55, 0.0
    %vm58 = vcmp.eq.f32.partialorder %v56, 0.0
    %v59 = vsel %vm57, 1.0, %v55
    %v60 = vsel %vm58, 1.0, %v56
    %v61 = vrcp.pop %v59
    %v62 = vmul.f32 %v59, %v61
    %v63 = vsub.f32 1.0, %v62
    %v64 = vmul.f32 %v61, %v63
    %v65 = vadd.f32 %v61, %v64
    %vm66 = vweird.f32 %v59
    %vm67 = vweird.f32 %v61
    %vm68 = vmor %vm66, %vm67
    %v69 = vsel %vm68, %v61, %v65
    %v70 = vand.u32 2147483647, %v59
    %vm71 = vcmp.eq.f32.partialorder %v70, 8.507059e+37
    %v72 = vand.u32 %v59, 2147483648
    %v73 = vor.u32 1.1754944e-38, %v72
    %v74 = vsel %vm71, %v73, %v69
    %v75 = vmul.f32 1.0, %v74
    %v76 = vrcp.pop %v60
    %v77 = vmul.f32 %v60, %v76
    %v78 = vsub.f32 1.0, %v77
    %v79 = vmul.f32 %v76, %v78
    %v80 = vadd.f32 %v76, %v79
    %vm81 = vweird.f32 %v60
    %vm82 = vweird.f32 %v76
    %vm83 = vmor %vm81, %vm82
    %v84 = vsel %vm83, %v76, %v80
    %v85 = vand.u32 2147483647, %v60
    %vm86 = vcmp.eq.f32.partialorder %v85, 8.507059e+37
    %v87 = vand.u32 %v60, 2147483648
    %v88 = vor.u32 1.1754944e-38, %v87
    %v89 = vsel %vm86, %v88, %v84
    %v90 = vmul.f32 1.0, %v89
    %v91 = vmul.f32 %v47, %v75
    %v92 = vmul.f32 %v48, %v90
    %v93 = vmul.f32 %v49, %v75
    %v94 = vmul.f32 %v50, %v90
    %v95 = vmul.f32 %v91, %v91
    %v96 = vmul.f32 %v92, %v92
    %v97 = vmul.f32 %v93, %v93
    %v98 = vmul.f32 %v94, %v94
    %v99 = vadd.f32 %v95, %v97
    %v100 = vadd.f32 %v96, %v98
    %vm101 = vcmp.eq.f32.partialorder %v99, 0.0
    %vm102 = vcmp.eq.f32.partialorder %v100, 0.0
    %v103 = vsel %vm101, 1.0, %v99
    %v104 = vsel %vm102, 1.0, %v100
    %v105 = vrsqrt.pop %v103
    %v106 = vmul.f32 %v105, %v103
    %v107 = vmul.f32 %v106, %v105
    %v108 = vmul.f32 0.5, %v107
    %v109 = vsub.f32 1.5, %v108
    %v110 = vmul.f32 %v105, %v109
    %vm111 = vweird.f32 %v103
    %vm112 = vweird.f32 %v105
    %vm113 = vmor %vm111, %vm112
    %v114 = vsel %vm113, %v105, %v110
    %v115 = vrsqrt.pop %v104
    %v116 = vmul.f32 %v115, %v104
    %v117 = vmul.f32 %v116, %v115
    %v118 = vmul.f32 0.5, %v117
    %v119 = vsub.f32 1.5, %v118
    %v120 = vmul.f32 %v115, %v119
    %vm121 = vweird.f32 %v104
    %vm122 = vweird.f32 %v115
    %vm123 = vmor %vm121, %vm122
    %v124 = vsel %vm123, %v115, %v120
    %v125 = vmul.f32 %v91, %v114
    %v126 = vmul.f32 %v92, %v124
    %v127 = vmul.f32 %v125, 0.5
    %v128 = vmul.f32 %v126, 0.5
    %v129 = vadd.f32 %v127, 0.5
    %v130 = vadd.f32 %v128, 0.5
    %v131 = vmul.f32 %v129, %v47
    %v132 = vmul.f32 %v130, %v48
    %133 = vst [vmem:[#allocation7] sm:$0xff] %v131
    %134 = vst [vmem:[#allocation7 + $0x8] sm:$0xff] %v132
    %v135 = vmul.f32 %v129, %v49
    %v136 = vmul.f32 %v130, %v50
    %137 = vst [vmem:[#allocation8] sm:$0xff] %v135
    %138 = vst [vmem:[#allocation8 + $0x8] sm:$0xff] %v136
    // Predicated region
    $region18: #{tpu_custom_call.1} parent=1 // pred_check
      _
    $region19: #{tpu_custom_call.1} parent=1 // pred_check_branch
      %140 = sbr.rel (0) target = $region21
    $region20: #{tpu_custom_call.1} parent=1 // pred_region
      %142 = vsyncadd [#allocation4], 0
      %s143 = sshll.u32 [#allocation7], 4
      %s144 = int_to_ptr.vmem [resolvable:$true] %s143
      %s145 = sshll.u32 %s2, 4
      %s146 = int_to_ptr.hbm [resolvable:$true] %s145
      %151 = dma.vmem_to_hbm [thread:$0]  %s144, 256, %s146, [#allocation4], 128, 128, 8
    $region21: #{tpu_custom_call.1} parent=1 // pred_fallthru
      _
    // Predicated region
    $region22: #{tpu_custom_call.1} parent=1 // pred_check
      _
    $region23: #{tpu_custom_call.1} parent=1 // pred_check_branch
      %153 = sbr.rel (0) target = $region25
    $region24: #{tpu_custom_call.1} parent=1 // pred_region
      %155 = vsyncadd [#allocation9], 0
      %s156 = sshll.u32 [#allocation8], 4
      %s157 = int_to_ptr.vmem [resolvable:$true] %s156
      %s158 = sshll.u32 %s3, 4
      %s159 = int_to_ptr.hbm [resolvable:$true] %s158
      %164 = dma.vmem_to_hbm [thread:$0]  %s157, 256, %s159, [#allocation9], 128, 128, 8
    $region25: #{tpu_custom_call.1} parent=1 // pred_fallthru
      _
    // Predicated region
    $region26: #{tpu_custom_call.1} parent=1 // pred_check
      _
    $region27: #{tpu_custom_call.1} parent=1 // pred_check_branch
      %166 = sbr.rel (0) target = $region29
    $region28: #{tpu_custom_call.1} parent=1 // pred_region
      %168 = dma.done [#allocation4], 256
    $region29: #{tpu_custom_call.1} parent=1 // pred_fallthru
      _
    // Predicated region
    $region30: #{tpu_custom_call.1} parent=1 // pred_check
      _
    $region31: #{tpu_custom_call.1} parent=1 // pred_check_branch
      %170 = sbr.rel (0) target = $region33
    $region32: #{tpu_custom_call.1} parent=1 // pred_region
      %172 = dma.done [#allocation9], 256
    $region33: #{tpu_custom_call.1} parent=1 // pred_fallthru
      _
    %173 = vsyncpa [#allocation3], 1
    %174 = vsyncpa [#allocation6], 1
    %175 = vsyncpa [#allocation4], 1
    %176 = vsyncpa [#allocation9], 1

</llo_original>
